<compile_context>
chip_gen: v5e
topology: v5e:2x2
jax: 0.10.0
libtpu: 0.0.40
codegen_flags: <defaults>
</compile_context>

<pallas_src>
import jax
import jax.numpy as jnp
import numpy as np
from jax.experimental import pallas as pl
from jax.experimental.pallas import tpu as pltpu


def _round_up(x, m):
    return (x + m - 1) // m * m


def _vmem_capacity_bytes():
    """Per-core VMEM capacity, with a conservative fallback (v7x = 64 MiB)."""
    try:
        cap = int(pltpu.get_tpu_info().vmem_capacity_bytes)
        if cap > 0:
            return cap
    except Exception:
        pass
    return 64 << 20


# ---------------------------------------------------------------------------
# Kernel 1: interaction + fc1(+BN1)+ReLU + fc2(+BN2)+ReLU.  Runs once per call.
# ---------------------------------------------------------------------------
def mlp_kernel(sub_ref, rel_ref, w1_ref, a1_ref, c1_ref,
               w2_ref, a2_ref, c2_ref, y_ref):
    x = sub_ref[...] * rel_ref[...]                                # (Bp, D) f32
    h = jnp.dot(x.astype(w1_ref.dtype), w1_ref[...],
                preferred_element_type=jnp.float32)                # (Bp, H)
    h = jnp.maximum(h * a1_ref[...] + c1_ref[...], 0.0)            # bn1 (+b1 folded) + relu
    y = jnp.dot(h.astype(w2_ref.dtype), w2_ref[...],
                preferred_element_type=jnp.float32)                # (Bp, D)
    y = jnp.maximum(y * a2_ref[...] + c2_ref[...], 0.0)            # bn2 (+b2 folded) + relu
    y_ref[...] = y.astype(y_ref.dtype)


# ---------------------------------------------------------------------------
# Kernel 2: score = sigmoid(y @ ent_t + bias), tiled along num_ent.
# ent_t is the pre-transposed (D, num_ent_pad) bf16 entity table, so each grid
# step is a plain (Bp, D) x (D, tn) MXU matmul on a streamed bf16 tile; the
# small y activation stays resident (constant index_map) and the (Bp, tn)
# output tile is lane-dense.
# ---------------------------------------------------------------------------
def score_kernel(y_ref, ent_ref, bias_ref, out_ref):
    logits = jnp.dot(y_ref[...], ent_ref[...],
                     preferred_element_type=jnp.float32)           # (Bp, TN)
    out_ref[...] = jax.nn.sigmoid(logits + bias_ref[...]).astype(out_ref.dtype)


# ---------------------------------------------------------------------------
# One-time preprocessing (NOT in the per-query path).
# ---------------------------------------------------------------------------
def prepare_params(params, *, max_batch=256, compute_dtype=jnp.bfloat16,
                   score_dtype=jnp.float32, target_tile_bytes=4 << 20):
    eps = 1e-5
    all_ent = params["main_ent"]                                   # (num_ent, D) f32
    num_ent, D = all_ent.shape
    H = params["fc1_w"].shape[1]

    # Fold eval-mode BatchNorm1d AND the linear bias into scale/shift:
    #   (x@W + b - mean) * g/sqrt(var+eps) + beta == (x@W)*s + ((b-mean)*s + beta)
    s1 = params["bn1_gamma"] / jnp.sqrt(params["bn1_var"] + eps)
    t1 = (params["fc1_b"] - params["bn1_mean"]) * s1 + params["bn1_beta"]
    s2 = params["bn2_gamma"] / jnp.sqrt(params["bn2_var"] + eps)
    t2 = (params["fc2_b"] - params["bn2_mean"]) * s2 + params["bn2_beta"]

    esize = jnp.dtype(compute_dtype).itemsize
    osize = jnp.dtype(score_dtype).itemsize
    Bp_budget = _round_up(max(int(max_batch), 8), 8)               # explicit batch assumption

    # Generation-aware tile sizing: ~40% of per-core VMEM for the streamed
    # double-buffered entity + output tiles (v5e/v6e: ~51 MiB, v7x: ~25 MiB).
    vmem_cap = _vmem_capacity_bytes()
    tile_budget = int(0.4 * vmem_cap)
    per_col = 2 * D * esize + 2 * Bp_budget * osize + 2 * 4        # per entity column
    fixed = 2 * Bp_budget * D * esize                              # resident y (2-buffered)
    tn_cap = max((max(tile_budget - fixed, 0) // max(per_col, 1)), 128)
    tn_cap = max((tn_cap // 128) * 128, 128)
    # At least ~target_tile_bytes of entity data per tile so the fixed
    # ~0.35 us/grid-step overhead is negligible against the HBM stream.
    tn_target = _round_up(max(target_tile_bytes // (D * esize), 128), 128)
    tn = min(max(tn_target, 128), tn_cap, _round_up(num_ent, 128))
    tn = max((tn // 128) * 128, 128)
    num_ent_pad = _round_up(num_ent, tn)

    # One-time bf16 cast + transpose: kernel sees contiguous (D, tn) RHS tiles.
    ent_t = jnp.zeros((D, num_ent_pad), compute_dtype).at[:, :num_ent].set(
        all_ent.astype(compute_dtype).T)
    bias_c = jnp.zeros((1, num_ent_pad), jnp.float32).at[0, :num_ent].set(
        params["ent_bias"].astype(jnp.float32))

    row = lambda v: v.reshape(1, -1).astype(jnp.float32)
    return {
        "D": D, "H": H, "num_ent": num_ent, "num_ent_pad": num_ent_pad,
        "tile_n": tn, "max_bp": Bp_budget, "vmem_cap": vmem_cap,
        "compute_dtype": compute_dtype, "score_dtype": score_dtype,
        "ent_t": ent_t, "bias_c": bias_c,
        "w1_c": params["fc1_w"].astype(compute_dtype),
        "w2_c": params["fc2_w"].astype(compute_dtype),
        "a1": row(s1), "c1": row(t1),
        "a2": row(s2), "c2": row(t2),
    }


def d1_mlp_forward(sub, rel, params, prep):
    """Per-query path: gather embeddings, run the two Pallas kernels."""
    all_ent = params["main_ent"]
    all_rel = params["main_rel"]
    D, H = prep["D"], prep["H"]
    tn, n_pad = prep["tile_n"], prep["num_ent_pad"]
    num_ent = prep["num_ent"]
    cdt = prep["compute_dtype"]
    odt = prep["score_dtype"]
    esize = jnp.dtype(cdt).itemsize
    osize = jnp.dtype(odt).itemsize
    vmem_cap = prep["vmem_cap"]

    B = sub.shape[0]
    # Sublane-align the batch.  For real throughput, batch/pad B to >=128
    # (v5e) / 256 (v6e, v7x) so the MXU M dimension is fully used.
    Bp = _round_up(max(B, 8), 8)
    if Bp > prep["max_bp"]:
        raise ValueError(f"batch {B} (padded {Bp}) exceeds max_batch="
                         f"{prep['max_bp']} used for VMEM tile sizing")

    # Gather-then-cast: never converts the full entity/relation tables here.
    sub_emb = jnp.take(all_ent, sub, axis=0).astype(jnp.float32)   # (B, D)
    rel_emb = jnp.take(all_rel, rel, axis=0).astype(jnp.float32)   # (B, D)
    pad = ((0, Bp - B), (0, 0))
    sub_emb = jnp.pad(sub_emb, pad)
    rel_emb = jnp.pad(rel_emb, pad)

    def full(shape):
        return pl.BlockSpec(shape, lambda i: (0,) * len(shape))

    # --- stage 1: small fused MLP, computed exactly once ---------------------
    # (grid=(1,); default double-buffering of the weights is counted in the
    #  VMEM estimate.  TODO(synk): K-tile this stage for very large D/H.)
    mlp_vmem = (2 * 2 * (D * H + H * D) * esize       # fc weights, 2-buffered
                + 4 * 2 * Bp * (D + H)                # f32 activations / inputs
                + 2 * 2 * Bp * D * esize              # output
                + 4 * 2 * 2 * (H + D))                # scale/shift rows
    y = pl.pallas_call(
        mlp_kernel,
        out_shape=jax.ShapeDtypeStruct((Bp, D), cdt),
        grid=(1,),
        in_specs=[full((Bp, D)), full((Bp, D)),
                  full((D, H)), full((1, H)), full((1, H)),
                  full((H, D)), full((1, D)), full((1, D))],
        out_specs=full((Bp, D)),
        compiler_params=pltpu.CompilerParams(
            dimension_semantics=("arbitrary",),
            vmem_limit_bytes=int(min(max(int(1.5 * mlp_vmem), 16 << 20),
                                     int(0.9 * vmem_cap)))),
    )(sub_emb, rel_emb,
      prep["w1_c"], prep["a1"], prep["c1"],
      prep["w2_c"], prep["a2"], prep["c2"])

    # --- stage 2: scoring, streamed over entity tiles ------------------------
    score_vmem = (2 * D * tn * esize        # double-buffered entity tiles
                  + 2 * Bp * tn * osize     # double-buffered output tiles
                  + 2 * Bp * D * esize      # resident y
                  + 2 * tn * 4)             # bias tiles
    # TODO(synk): on v7x verify "parallel" shards the entity axis across both
    # TensorCores; otherwise switch to pltpu.CORE_PARALLEL / pl.core_map.
    score = pl.pallas_call(
        score_kernel,
        out_shape=jax.ShapeDtypeStruct((Bp, n_pad), odt),
        grid=(n_pad // tn,),
        in_specs=[
            pl.BlockSpec((Bp, D), lambda j: (0, 0)),    # y (resident)
            pl.BlockSpec((D, tn), lambda j: (0, j)),    # entity tile (pre-transposed)
            pl.BlockSpec((1, tn), lambda j: (0, j)),    # entity-bias tile
        ],
        out_specs=pl.BlockSpec((Bp, tn), lambda j: (0, j)),
        compiler_params=pltpu.CompilerParams(
            dimension_semantics=("parallel",),
            vmem_limit_bytes=int(min(max(int(1.25 * score_vmem) + (4 << 20),
                                         16 << 20),
                                     int(0.9 * vmem_cap)))),
    )(y, prep["ent_t"], prep["bias_c"])

    return score[:B, :num_ent], all_ent, all_rel


def make_params(key, num_ent, num_rel, embed_dim, cluster_total):
    D = embed_dim * cluster_total            # downsample == 0 -> dimensions = D
    H = 2 * cluster_total * embed_dim
    ks = jax.random.split(key, 12)
    return {
        "main_ent": jax.random.normal(ks[0], (num_ent, D), jnp.float32) * 0.1,
        "main_rel": jax.random.normal(ks[1], (num_rel, D), jnp.float32) * 0.1,
        "fc1_w": jax.random.normal(ks[2], (D, H), jnp.float32) * 0.1,
        "fc1_b": jax.random.normal(ks[3], (H,), jnp.float32) * 0.1,
        "fc2_w": jax.random.normal(ks[4], (H, D), jnp.float32) * 0.1,
        "fc2_b": jax.random.normal(ks[5], (D,), jnp.float32) * 0.1,
        "bn1_gamma": 1.0 + 0.1 * jax.random.normal(ks[6], (H,), jnp.float32),
        "bn1_beta": 0.1 * jax.random.normal(ks[7], (H,), jnp.float32),
        "bn1_mean": 0.05 * jax.random.normal(ks[8], (H,), jnp.float32),
        "bn1_var": 0.5 + jax.random.uniform(ks[9], (H,), jnp.float32),
        "bn2_gamma": 1.0 + 0.1 * jax.random.normal(ks[10], (D,), jnp.float32),
        "bn2_beta": jnp.zeros((D,), jnp.float32),
        "bn2_mean": jnp.zeros((D,), jnp.float32),
        "bn2_var": jnp.ones((D,), jnp.float32),
        "ent_bias": 0.1 * jax.random.normal(ks[11], (num_ent,), jnp.float32),
    }


def reference_forward(sub, rel, params):
    """Pure-JAX f32 reference with identical semantics (sanity check)."""
    all_ent = params["main_ent"]
    all_rel = params["main_rel"]
    eps = 1e-5
    x = jnp.take(all_ent, sub, 0) * jnp.take(all_rel, rel, 0)
    x = x @ params["fc1_w"] + params["fc1_b"]
    x = (x - params["bn1_mean"]) / jnp.sqrt(params["bn1_var"] + eps) \
        * params["bn1_gamma"] + params["bn1_beta"]
    x = jnp.maximum(x, 0.0)
    x = x @ params["fc2_w"] + params["fc2_b"]
    x = (x - params["bn2_mean"]) / jnp.sqrt(params["bn2_var"] + eps) \
        * params["bn2_gamma"] + params["bn2_beta"]
    x = jnp.maximum(x, 0.0)
    x = x @ all_ent.T + params["ent_bias"]
    return jax.nn.sigmoid(x)


if __name__ == "__main__":
    # Small but tiling-exercising shapes: D=128 (lane-aligned), num_ent not a
    # multiple of 128 (exercises padding), batch not a multiple of 8.
    num_ent, num_rel = 300, 11
    embed_dim, cluster_total = 64, 2         # D = 128, H = 256
    batch = 5

    key = jax.random.PRNGKey(0)
    k_par, k_sub, k_rel = jax.random.split(key, 3)
    params = make_params(k_par, num_ent, num_rel, embed_dim, cluster_total)
    prep = prepare_params(params)            # byte-sized, generation-aware tiles

    sub = jax.random.randint(k_sub, (batch,), 0, num_ent, dtype=jnp.int32)
    rel = jax.random.randint(k_rel, (batch,), 0, num_rel, dtype=jnp.int32)

    score, all_ent, final_rel = d1_mlp_forward(sub, rel, params, prep)
    score = jax.block_until_ready(score)

    ref = reference_forward(sub, rel, params)
    assert score.shape == ref.shape
    err = float(np.max(np.abs(np.asarray(score) - np.asarray(ref))))
    assert np.allclose(np.asarray(score), np.asarray(ref), atol=1e-2, rtol=1e-2), err

    print("KERNEL_OK")
</pallas_src>

<mosaic_0001>
module attributes {stable_mosaic.version = 11 : i64} {
  func.func @mlp_kernel(%arg0: i32, %arg1: memref<8x128xf32, #tpu.memory_space<vmem>>, %arg2: memref<8x128xf32, #tpu.memory_space<vmem>>, %arg3: memref<128x256xbf16, #tpu.memory_space<vmem>>, %arg4: memref<1x256xf32, #tpu.memory_space<vmem>>, %arg5: memref<1x256xf32, #tpu.memory_space<vmem>>, %arg6: memref<256x128xbf16, #tpu.memory_space<vmem>>, %arg7: memref<1x128xf32, #tpu.memory_space<vmem>>, %arg8: memref<1x128xf32, #tpu.memory_space<vmem>>, %arg9: memref<8x128xbf16, #tpu.memory_space<vmem>>) attributes {dimension_semantics = [#tpu.dimension_semantics<arbitrary>], iteration_bounds = array<i64: 1>, scalar_prefetch = 0 : i64, scratch_operands = 0 : i64, tpu.core_type = #tpu.core_type<tc>, window_params = [{pipeline_mode = #tpu.pipeline_mode<synchronous>, transform_indices = @transform_0, window_bounds = array<i64: 8, 128>}, {pipeline_mode = #tpu.pipeline_mode<synchronous>, transform_indices = @transform_1, window_bounds = array<i64: 8, 128>}, {pipeline_mode = #tpu.pipeline_mode<synchronous>, transform_indices = @transform_2, window_bounds = array<i64: 128, 256>}, {pipeline_mode = #tpu.pipeline_mode<synchronous>, transform_indices = @transform_3, window_bounds = array<i64: 1, 256>}, {pipeline_mode = #tpu.pipeline_mode<synchronous>, transform_indices = @transform_4, window_bounds = array<i64: 1, 256>}, {pipeline_mode = #tpu.pipeline_mode<synchronous>, transform_indices = @transform_5, window_bounds = array<i64: 256, 128>}, {pipeline_mode = #tpu.pipeline_mode<synchronous>, transform_indices = @transform_6, window_bounds = array<i64: 1, 128>}, {pipeline_mode = #tpu.pipeline_mode<synchronous>, transform_indices = @transform_7, window_bounds = array<i64: 1, 128>}, {pipeline_mode = #tpu.pipeline_mode<synchronous>, transform_indices = @transform_8, window_bounds = array<i64: 8, 128>}]} {
    %c0 = arith.constant 0 : index
    %c0_0 = arith.constant 0 : index
    %0 = vector.load %arg1[%c0, %c0_0] : memref<8x128xf32, #tpu.memory_space<vmem>>, vector<8x128xf32>
    %c0_1 = arith.constant 0 : index
    %c0_2 = arith.constant 0 : index
    %1 = vector.load %arg2[%c0_1, %c0_2] : memref<8x128xf32, #tpu.memory_space<vmem>>, vector<8x128xf32>
    %2 = arith.mulf %0, %1 : vector<8x128xf32>
    %3 = arith.truncf %2 : vector<8x128xf32> to vector<8x128xbf16>
    %c0_3 = arith.constant 0 : index
    %c0_4 = arith.constant 0 : index
    %4 = vector.load %arg3[%c0_3, %c0_4] : memref<128x256xbf16, #tpu.memory_space<vmem>>, vector<128x256xbf16>
    %cst = arith.constant dense<0.000000e+00> : vector<8x256xf32>
    %5 = tpu.matmul %3, %4, %cst {dimension_numbers = #tpu.dot_dimension_numbers<[1], [0], [0], [1], [0, 0, 1, 1], [], []>} : vector<8x128xbf16>, vector<128x256xbf16>, vector<8x256xf32> -> vector<8x256xf32>
    %c0_5 = arith.constant 0 : index
    %c0_6 = arith.constant 0 : index
    %6 = vector.load %arg4[%c0_5, %c0_6] : memref<1x256xf32, #tpu.memory_space<vmem>>, vector<1x256xf32>
    %7 = vector.broadcast %6 : vector<1x256xf32> to vector<8x256xf32>
    %8 = arith.mulf %5, %7 : vector<8x256xf32>
    %c0_7 = arith.constant 0 : index
    %c0_8 = arith.constant 0 : index
    %9 = vector.load %arg5[%c0_7, %c0_8] : memref<1x256xf32, #tpu.memory_space<vmem>>, vector<1x256xf32>
    %10 = vector.broadcast %9 : vector<1x256xf32> to vector<8x256xf32>
    %11 = arith.addf %8, %10 : vector<8x256xf32>
    %cst_9 = arith.constant 0.000000e+00 : f32
    %12 = vector.broadcast %cst_9 : f32 to vector<8x256xf32>
    %13 = arith.maximumf %11, %12 : vector<8x256xf32>
    %14 = arith.truncf %13 : vector<8x256xf32> to vector<8x256xbf16>
    %c0_10 = arith.constant 0 : index
    %c0_11 = arith.constant 0 : index
    %15 = vector.load %arg6[%c0_10, %c0_11] : memref<256x128xbf16, #tpu.memory_space<vmem>>, vector<256x128xbf16>
    %cst_12 = arith.constant dense<0.000000e+00> : vector<8x128xf32>
    %16 = tpu.matmul %14, %15, %cst_12 {dimension_numbers = #tpu.dot_dimension_numbers<[1], [0], [0], [1], [0, 0, 1, 1], [], []>} : vector<8x256xbf16>, vector<256x128xbf16>, vector<8x128xf32> -> vector<8x128xf32>
    %c0_13 = arith.constant 0 : index
    %c0_14 = arith.constant 0 : index
    %17 = vector.load %arg7[%c0_13, %c0_14] : memref<1x128xf32, #tpu.memory_space<vmem>>, vector<1x128xf32>
    %18 = vector.broadcast %17 : vector<1x128xf32> to vector<8x128xf32>
    %19 = arith.mulf %16, %18 : vector<8x128xf32>
    %c0_15 = arith.constant 0 : index
    %c0_16 = arith.constant 0 : index
    %20 = vector.load %arg8[%c0_15, %c0_16] : memref<1x128xf32, #tpu.memory_space<vmem>>, vector<1x128xf32>
    %21 = vector.broadcast %20 : vector<1x128xf32> to vector<8x128xf32>
    %22 = arith.addf %19, %21 : vector<8x128xf32>
    %cst_17 = arith.constant 0.000000e+00 : f32
    %23 = vector.broadcast %cst_17 : f32 to vector<8x128xf32>
    %24 = arith.maximumf %22, %23 : vector<8x128xf32>
    %25 = arith.truncf %24 : vector<8x128xf32> to vector<8x128xbf16>
    %c0_18 = arith.constant 0 : index
    %c0_19 = arith.constant 0 : index
    %26 = vector.load %arg9[%c0_18, %c0_19] : memref<8x128xbf16, #tpu.memory_space<vmem>>, vector<8x128xbf16>
    tpu.vector_store %arg9[%c0_18, %c0_19], %25 {strides = array<i32>} : memref<8x128xbf16, #tpu.memory_space<vmem>>, vector<8x128xbf16>,
    return
  }
  func.func @transform_0(%arg0: i32) -> (i32, i32) {
    %c0_i32 = arith.constant 0 : i32
    %c0_i32_0 = arith.constant 0 : i32
    %c0_i32_1 = arith.constant 0 : i32
    return %c0_i32, %c0_i32_0 : i32, i32
  }
  func.func @transform_1(%arg0: i32) -> (i32, i32) {
    %c0_i32 = arith.constant 0 : i32
    %c0_i32_0 = arith.constant 0 : i32
    %c0_i32_1 = arith.constant 0 : i32
    return %c0_i32, %c0_i32_0 : i32, i32
  }
  func.func @transform_2(%arg0: i32) -> (i32, i32) {
    %c0_i32 = arith.constant 0 : i32
    %c0_i32_0 = arith.constant 0 : i32
    %c0_i32_1 = arith.constant 0 : i32
    return %c0_i32, %c0_i32_0 : i32, i32
  }
  func.func @transform_3(%arg0: i32) -> (i32, i32) {
    %c0_i32 = arith.constant 0 : i32
    %c0_i32_0 = arith.constant 0 : i32
    %c0_i32_1 = arith.constant 0 : i32
    return %c0_i32, %c0_i32_0 : i32, i32
  }
  func.func @transform_4(%arg0: i32) -> (i32, i32) {
    %c0_i32 = arith.constant 0 : i32
    %c0_i32_0 = arith.constant 0 : i32
    %c0_i32_1 = arith.constant 0 : i32
    return %c0_i32, %c0_i32_0 : i32, i32
  }
  func.func @transform_5(%arg0: i32) -> (i32, i32) {
    %c0_i32 = arith.constant 0 : i32
    %c0_i32_0 = arith.constant 0 : i32
    %c0_i32_1 = arith.constant 0 : i32
    return %c0_i32, %c0_i32_0 : i32, i32
  }
  func.func @transform_6(%arg0: i32) -> (i32, i32) {
    %c0_i32 = arith.constant 0 : i32
    %c0_i32_0 = arith.constant 0 : i32
    %c0_i32_1 = arith.constant 0 : i32
    return %c0_i32, %c0_i32_0 : i32, i32
  }
  func.func @transform_7(%arg0: i32) -> (i32, i32) {
    %c0_i32 = arith.constant 0 : i32
    %c0_i32_0 = arith.constant 0 : i32
    %c0_i32_1 = arith.constant 0 : i32
    return %c0_i32, %c0_i32_0 : i32, i32
  }
  func.func @transform_8(%arg0: i32) -> (i32, i32) {
    %c0_i32 = arith.constant 0 : i32
    %c0_i32_0 = arith.constant 0 : i32
    %c0_i32_1 = arith.constant 0 : i32
    return %c0_i32, %c0_i32_0 : i32, i32
  }
}

</mosaic_0001>

<llo_original>
// kernel: tpu_custom_call.1
$region0: #{tpu_custom_call.1}
  #allocation0 [shape = 'u32[]', space=smem, size = 0x4, offset = 0x4, fixed_abs, tag = 'smem constant byte address 0x4 - core index']
  #allocation1 [shape = 'u32[72,128]{1,0:T(1,128)}', space=vmem, size = 0x9000, scoped, tag = 'internal scratch']
  %s0 = inlined_call_operand.hbm [shape: f32[8,128], index: 0, kind: input, shape index: {}]
  %s1 = inlined_call_operand.hbm [shape: f32[8,128], index: 1, kind: input, shape index: {}]
  %s2 = inlined_call_operand.hbm [shape: bf16[128,256], index: 2, kind: input, shape index: {}]
  %s3 = inlined_call_operand.vmem [shape: f32[1,256], index: 3, kind: input, shape index: {}]
  %s4 = inlined_call_operand.hbm [shape: f32[1,256], index: 4, kind: input, shape index: {}]
  %s5 = inlined_call_operand.hbm [shape: bf16[256,128], index: 5, kind: input, shape index: {}]
  %s6 = inlined_call_operand.vmem [shape: f32[1,128], index: 6, kind: input, shape index: {}]
  %s7 = inlined_call_operand.vmem [shape: f32[1,128], index: 7, kind: input, shape index: {}]
  %s8 = inlined_call_operand.hbm [shape: bf16[8,128], index: 8, kind: output, shape index: {}]
  %s9 = sld [smem:[#allocation0]]
  $region62: #{tpu_custom_call.1} parent=0
    _
  %s11 = ssub.s32 1, %s9
  %s12 = scalar_select 0, %s11, %s9
  $region1: #{tpu_custom_call.1} parent=0
    #allocation2 [shape = 'u8[4096]{0}', space=vmem, size = 0x1000, scoped, tag = 'input window, operand 0, single buffered']
    #allocation3 [shape = 's32[1]{0}', space=sflag, size = 0x4, scoped, tag = 'scoped memory for tpu_custom_call.1']
    #allocation4 [shape = 's32[1]{0}', space=sflag, size = 0x4, scoped, tag = 'scoped memory for tpu_custom_call.1']
    #allocation5 [shape = 'u8[4096]{0}', space=vmem, size = 0x1000, scoped, tag = 'input window, operand 1, single buffered']
    #allocation6 [shape = 's32[1]{0}', space=sflag, size = 0x4, scoped, tag = 'scoped memory for tpu_custom_call.1']
    #allocation7 [shape = 'u8[65536]{0}', space=vmem, size = 0x10000, scoped, tag = 'input window, operand 2, single buffered']
    #allocation8 [shape = 'u8[1024]{0}', space=vmem, size = 0x400, scoped, tag = 'input window, operand 4, single buffered']
    #allocation9 [shape = 's32[1]{0}', space=sflag, size = 0x4, scoped, tag = 'scoped memory for tpu_custom_call.1']
    #allocation10 [shape = 'u8[65536]{0}', space=vmem, size = 0x10000, scoped, tag = 'input window, operand 5, single buffered']
    #allocation11 [shape = 'u8[2048]{0}', space=vmem, size = 0x800, scoped, tag = 'output window, operand 0, single buffered']
    %13 = vsyncpa [#allocation3], 0
    %14 = vsyncpa [#allocation6], 0
    %15 = vsyncpa [#allocation9], 0
    %16 = vsyncpa [#allocation4], 0
    // Predicated region
    $region2: #{tpu_custom_call.1} parent=1 // pred_check
      _
    $region3: #{tpu_custom_call.1} parent=1 // pred_check_branch
      %18 = sbr.rel (0) target = $region5
    $region4: #{tpu_custom_call.1} parent=1 // pred_region
      %20 = vsyncadd [#allocation3], 0
      %s22 = sshll.u32 %s0, 4
      %s23 = int_to_ptr.hbm [resolvable:$true] %s22
      %s24 = sshll.u32 [#allocation2], 4
      %s25 = int_to_ptr.vmem [resolvable:$true] %s24
      %27 = dma.hbm_to_vmem [thread:$0]  %s23, 128, %s25, [#allocation3]
    $region5: #{tpu_custom_call.1} parent=1 // pred_fallthru
      _
    // Predicated region
    $region6: #{tpu_custom_call.1} parent=1 // pred_check
      _
    $region7: #{tpu_custom_call.1} parent=1 // pred_check_branch
      %29 = sbr.rel (0) target = $region9
    $region8: #{tpu_custom_call.1} parent=1 // pred_region
      %31 = vsyncadd [#allocation6], 0
      %s33 = sshll.u32 %s1, 4
      %s34 = int_to_ptr.hbm [resolvable:$true] %s33
      %s35 = sshll.u32 [#allocation5], 4
      %s36 = int_to_ptr.vmem [resolvable:$true] %s35
      %38 = dma.hbm_to_vmem [thread:$0]  %s34, 128, %s36, [#allocation6]
    $region9: #{tpu_custom_call.1} parent=1 // pred_fallthru
      _
    // Predicated region
    $region10: #{tpu_custom_call.1} parent=1 // pred_check
      _
    $region11: #{tpu_custom_call.1} parent=1 // pred_check_branch
      %40 = sbr.rel (0) target = $region13
    $region12: #{tpu_custom_call.1} parent=1 // pred_region
      %42 = vsyncadd [#allocation6], 0
      %s43 = sshll.u32 %s2, 4
      %s44 = int_to_ptr.hbm [resolvable:$true] %s43
      %s45 = sshll.u32 [#allocation7], 4
      %s46 = int_to_ptr.vmem [resolvable:$true] %s45
      %51 = dma.hbm_to_vmem [thread:$0]  %s44, 2048, %s46, [#allocation6], 128, 128, 8
    $region13: #{tpu_custom_call.1} parent=1 // pred_fallthru
      _
    // Predicated region
    $region14: #{tpu_custom_call.1} parent=1 // pred_check
      _
    $region15: #{tpu_custom_call.1} parent=1 // pred_check_branch
      %53 = sbr.rel (0) target = $region17
    $region16: #{tpu_custom_call.1} parent=1 // pred_region
      _
    $region17: #{tpu_custom_call.1} parent=1 // pred_fallthru
      _
    // Predicated region
    $region18: #{tpu_custom_call.1} parent=1 // pred_check
      _
    $region19: #{tpu_custom_call.1} parent=1 // pred_check_branch
      %55 = sbr.rel (0) target = $region21
    $region20: #{tpu_custom_call.1} parent=1 // pred_region
      %57 = vsyncadd [#allocation9], 0
      %s59 = sshll.u32 %s4, 4
      %s60 = int_to_ptr.hbm [resolvable:$true] %s59
      %s61 = sshll.u32 [#allocation8], 4
      %s62 = int_to_ptr.vmem [resolvable:$true] %s61
      %64 = dma.hbm_to_vmem [thread:$0]  %s60, 32, %s62, [#allocation9]
    $region21: #{tpu_custom_call.1} parent=1 // pred_fallthru
      _
    // Predicated region
    $region22: #{tpu_custom_call.1} parent=1 // pred_check
      _
    $region23: #{tpu_custom_call.1} parent=1 // pred_check_branch
      %66 = sbr.rel (0) target = $region25
    $region24: #{tpu_custom_call.1} parent=1 // pred_region
      %68 = vsyncadd [#allocation9], 0
      %s69 = sshll.u32 %s5, 4
      %s70 = int_to_ptr.hbm [resolvable:$true] %s69
      %s71 = sshll.u32 [#allocation10], 4
      %s72 = int_to_ptr.vmem [resolvable:$true] %s71
      %77 = dma.hbm_to_vmem [thread:$0]  %s70, 2048, %s72, [#allocation9], 64, 64, 4
    $region25: #{tpu_custom_call.1} parent=1 // pred_fallthru
      _
    // Predicated region
    $region26: #{tpu_custom_call.1} parent=1 // pred_check
      _
    $region27: #{tpu_custom_call.1} parent=1 // pred_check_branch
      %79 = sbr.rel (0) target = $region29
    $region28: #{tpu_custom_call.1} parent=1 // pred_region
      _
    $region29: #{tpu_custom_call.1} parent=1 // pred_fallthru
      _
    // Predicated region
    $region30: #{tpu_custom_call.1} parent=1 // pred_check
      _
    $region31: #{tpu_custom_call.1} parent=1 // pred_check_branch
      %81 = sbr.rel (0) target = $region33
    $region32: #{tpu_custom_call.1} parent=1 // pred_region
      _
    $region33: #{tpu_custom_call.1} parent=1 // pred_fallthru
      _
    // Predicated region
    $region34: #{tpu_custom_call.1} parent=1 // pred_check
      _
    $region35: #{tpu_custom_call.1} parent=1 // pred_check_branch
      %83 = sbr.rel (0) target = $region37
    $region36: #{tpu_custom_call.1} parent=1 // pred_region
      %85 = dma.done [#allocation3], 128
    $region37: #{tpu_custom_call.1} parent=1 // pred_fallthru
      _
    // Predicated region
    $region38: #{tpu_custom_call.1} parent=1 // pred_check
      _
    $region39: #{tpu_custom_call.1} parent=1 // pred_check_branch
      %87 = sbr.rel (0) target = $region41
    $region40: #{tpu_custom_call.1} parent=1 // pred_region
      %89 = dma.done [#allocation6], 128
    $region41: #{tpu_custom_call.1} parent=1 // pred_fallthru
      _
    // Predicated region
    $region42: #{tpu_custom_call.1} parent=1 // pred_check
      _
    $region43: #{tpu_custom_call.1} parent=1 // pred_check_branch
      %91 = sbr.rel (0) target = $region45
    $region44: #{tpu_custom_call.1} parent=1 // pred_region
      %93 = dma.done [#allocation6], 2048
    $region45: #{tpu_custom_call.1} parent=1 // pred_fallthru
      _
    // Predicated region
    $region46: #{tpu_custom_call.1} parent=1 // pred_check
      _
    $region47: #{tpu_custom_call.1} parent=1 // pred_check_branch
      %95 = sbr.rel (0) target = $region49
    $region48: #{tpu_custom_call.1} parent=1 // pred_region
      %97 = dma.done [#allocation9], 32
    $region49: #{tpu_custom_call.1} parent=1 // pred_fallthru
      _
    // Predicated region
    $region50: #{tpu_custom_call.1} parent=1 // pred_check
      _
    $region51: #{tpu_custom_call.1} parent=1 // pred_check_branch
      %99 = sbr.rel (0) target = $region53
    $region52: #{tpu_custom_call.1} parent=1 // pred_region
      %101 = dma.done [#allocation9], 2048
    $region53: #{tpu_custom_call.1} parent=1 // pred_fallthru
      _
    %v102 = vld [vmem:[#allocation2] sm:$0xff]
    %v103 = vld [vmem:[#allocation5] sm:$0xff]
    %v104 = vmul.f32 %v102, %v103
    %v105 = vpack.c.bf16 %v104, %v104
    %v106 = vld [vmem:[#allocation7] sm:$0xff]
    %v107 = vld [vmem:[#allocation7 + $0x8] sm:$0xff]
    %v108 = vld [vmem:[#allocation7 + $0x10] sm:$0xff]
    %v109 = vld [vmem:[#allocation7 + $0x18] sm:$0xff]
    %v110 = vld [vmem:[#allocation7 + $0x20] sm:$0xff]
    %v111 = vld [vmem:[#allocation7 + $0x28] sm:$0xff]
    %v112 = vld [vmem:[#allocation7 + $0x30] sm:$0xff]
    %v113 = vld [vmem:[#allocation7 + $0x38] sm:$0xff]
    %v114 = vld [vmem:[#allocation7 + $0x40] sm:$0xff]
    %v115 = vld [vmem:[#allocation7 + $0x48] sm:$0xff]
    %v116 = vld [vmem:[#allocation7 + $0x50] sm:$0xff]
    %v117 = vld [vmem:[#allocation7 + $0x58] sm:$0xff]
    %v118 = vld [vmem:[#allocation7 + $0x60] sm:$0xff]
    %v119 = vld [vmem:[#allocation7 + $0x68] sm:$0xff]
    %v120 = vld [vmem:[#allocation7 + $0x70] sm:$0xff]
    %v121 = vld [vmem:[#allocation7 + $0x78] sm:$0xff]
    %v138 = vunpack.c.l.b16 %v106
    %v139 = vunpack.c.h.b16 %v106
    %v140 = vunpack.c.l.b16 %v107
    %v141 = vunpack.c.h.b16 %v107
    %v142 = vunpack.c.l.b16 %v108
    %v143 = vunpack.c.h.b16 %v108
    %v144 = vunpack.c.l.b16 %v109
    %v145 = vunpack.c.h.b16 %v109
    %v146 = vunpack.c.l.b16 %v110
    %v147 = vunpack.c.h.b16 %v110
    %v148 = vunpack.c.l.b16 %v111
    %v149 = vunpack.c.h.b16 %v111
    %v150 = vunpack.c.l.b16 %v112
    %v151 = vunpack.c.h.b16 %v112
    %v152 = vunpack.c.l.b16 %v113
    %v153 = vunpack.c.h.b16 %v113
    %v154 = vunpack.c.l.b16 %v114
    %v155 = vunpack.c.h.b16 %v114
    %v156 = vunpack.c.l.b16 %v115
    %v157 = vunpack.c.h.b16 %v115
    %v158 = vunpack.c.l.b16 %v116
    %v159 = vunpack.c.h.b16 %v116
    %v160 = vunpack.c.l.b16 %v117
    %v161 = vunpack.c.h.b16 %v117
    %v162 = vunpack.c.l.b16 %v118
    %v163 = vunpack.c.h.b16 %v118
    %v164 = vunpack.c.l.b16 %v119
    %v165 = vunpack.c.h.b16 %v119
    %v166 = vunpack.c.l.b16 %v120
    %v167 = vunpack.c.h.b16 %v120
    %v168 = vunpack.c.l.b16 %v121
    %v169 = vunpack.c.h.b16 %v121
    %v170 = vpack.c.b16 %v140, %v138
    %v171 = vpack.c.b16 %v141, %v139
    %v172 = vpack.c.b16 %v144, %v142
    %v173 = vpack.c.b16 %v145, %v143
    %v174 = vpack.c.b16 %v148, %v146
    %v175 = vpack.c.b16 %v149, %v147
    %v176 = vpack.c.b16 %v152, %v150
    %v177 = vpack.c.b16 %v153, %v151
    %v178 = vpack.c.b16 %v156, %v154
    %v179 = vpack.c.b16 %v157, %v155
    %v180 = vpack.c.b16 %v160, %v158
    %v181 = vpack.c.b16 %v161, %v159
    %v182 = vpack.c.b16 %v164, %v162
    %v183 = vpack.c.b16 %v165, %v163
    %v184 = vpack.c.b16 %v168, %v166
    %v185 = vpack.c.b16 %v169, %v167
    %202 = vmatpush.bf16.msra.mxu0 %v184
    %203 = vmatpush.bf16.msra.mxu0 %v182
    %204 = vmatpush.bf16.msra.mxu0 %v180
    %205 = vmatpush.bf16.msra.mxu0 %v178
    %206 = vmatpush.bf16.msra.mxu0 %v176
    %207 = vmatpush.bf16.msra.mxu0 %v174
    %208 = vmatpush.bf16.msra.mxu0 %v172
    %209 = vmatpush.bf16.msra.mxu0 %v170
    %210 = vmatmul.bf16.gmra.mxu0 %v105
    %v211 = vpop.f32.mrf.mxu0
    %v212 = vadd.f32 0.0, %v211
    %v213 = vpop.f32.mrf.mxu0
    %214 = vdwg.mxu0
    %215 = vmatpush.bf16.msra.mxu0 %v185
    %216 = vmatpush.bf16.msra.mxu0 %v183
    %217 = vmatpush.bf16.msra.mxu0 %v181
    %218 = vmatpush.bf16.msra.mxu0 %v179
    %219 = vmatpush.bf16.msra.mxu0 %v177
    %220 = vmatpush.bf16.msra.mxu0 %v175
    %221 = vmatpush.bf16.msra.mxu0 %v173
    %222 = vmatpush.bf16.msra.mxu0 %v171
    %223 = vmatmul.bf16.gmra.mxu0 %v105
    %v224 = vpop.f32.mrf.mxu0
    %v225 = vadd.f32 0.0, %v224
    %v226 = vpop.f32.mrf.mxu0
    %227 = vdwg.mxu0
    %v228 = vld [vmem:[%s3] sm:$0x3]
    %v230 = vperm.slane %v228, 0
    %v231 = vperm.slane %v228, 1
    %v234 = vmul.f32 %v212, %v230
    %v235 = vmul.f32 %v225, %v231
    %v236 = vld [vmem:[#allocation8] sm:$0x3]
    %v238 = vperm.slane %v236, 0
    %v239 = vperm.slane %v236, 1
    %v242 = vadd.f32 %v234, %v238
    %v243 = vadd.f32 %v235, %v239
    %v244 = vmax.f32 %v242, 0.0
    %v245 = vmax.f32 %v243, 0.0
    %v246 = vpack.c.bf16 %v244, %v244
    %v247 = vpack.c.bf16 %v245, %v245
    %v248 = vld [vmem:[#allocation10] sm:$0xf]
    %v249 = vld [vmem:[#allocation10 + $0x4] sm:$0xf]
    %v250 = vld [vmem:[#allocation10 + $0x8] sm:$0xf]
    %v251 = vld [vmem:[#allocation10 + $0xc] sm:$0xf]
    %v252 = vld [vmem:[#allocation10 + $0x10] sm:$0xf]
    %v253 = vld [vmem:[#allocation10 + $0x14] sm:$0xf]
    %v254 = vld [vmem:[#allocation10 + $0x18] sm:$0xf]
    %v255 = vld [vmem:[#allocation10 + $0x1c] sm:$0xf]
    %v256 = vld [vmem:[#allocation10 + $0x20] sm:$0xf]
    %v257 = vld [vmem:[#allocation10 + $0x24] sm:$0xf]
    %v258 = vld [vmem:[#allocation10 + $0x28] sm:$0xf]
    %v259 = vld [vmem:[#allocation10 + $0x2c] sm:$0xf]
    %v260 = vld [vmem:[#allocation10 + $0x30] sm:$0xf]
    %v261 = vld [vmem:[#allocation10 + $0x34] sm:$0xf]
    %v262 = vld [vmem:[#allocation10 + $0x38] sm:$0xf]
    %v263 = vld [vmem:[#allocation10 + $0x3c] sm:$0xf]
    %v264 = vld [vmem:[#allocation10 + $0x40] sm:$0xf]
    %v265 = vld [vmem:[#allocation10 + $0x44] sm:$0xf]
    %v266 = vld [vmem:[#allocation10 + $0x48] sm:$0xf]
    %v267 = vld [vmem:[#allocation10 + $0x4c] sm:$0xf]
    %v268 = vld [vmem:[#allocation10 + $0x50] sm:$0xf]
    %v269 = vld [vmem:[#allocation10 + $0x54] sm:$0xf]
    %v270 = vld [vmem:[#allocation10 + $0x58] sm:$0xf]
    %v271 = vld [vmem:[#allocation10 + $0x5c] sm:$0xf]
    %v272 = vld [vmem:[#allocation10 + $0x60] sm:$0xf]
    %v273 = vld [vmem:[#allocation10 + $0x64] sm:$0xf]
    %v274 = vld [vmem:[#allocation10 + $0x68] sm:$0xf]
    %v275 = vld [vmem:[#allocation10 + $0x6c] sm:$0xf]
    %v276 = vld [vmem:[#allocation10 + $0x70] sm:$0xf]
    %v277 = vld [vmem:[#allocation10 + $0x74] sm:$0xf]
    %v278 = vld [vmem:[#allocation10 + $0x78] sm:$0xf]
    %v279 = vld [vmem:[#allocation10 + $0x7c] sm:$0xf]
    %v312 = vunpack.c.l.b16 %v248
    %v313 = vunpack.c.l.b16 %v249
    %v314 = vunpack.c.l.b16 %v250
    %v315 = vunpack.c.l.b16 %v251
    %v316 = vunpack.c.l.b16 %v252
    %v317 = vunpack.c.l.b16 %v253
    %v318 = vunpack.c.l.b16 %v254
    %v319 = vunpack.c.l.b16 %v255
    %v320 = vunpack.c.l.b16 %v256
    %v321 = vunpack.c.l.b16 %v257
    %v322 = vunpack.c.l.b16 %v258
    %v323 = vunpack.c.l.b16 %v259
    %v324 = vunpack.c.l.b16 %v260
    %v325 = vunpack.c.l.b16 %v261
    %v326 = vunpack.c.l.b16 %v262
    %v327 = vunpack.c.l.b16 %v263
    %v328 = vunpack.c.l.b16 %v264
    %v329 = vunpack.c.l.b16 %v265
    %v330 = vunpack.c.l.b16 %v266
    %v331 = vunpack.c.l.b16 %v267
    %v332 = vunpack.c.l.b16 %v268
    %v333 = vunpack.c.l.b16 %v269
    %v334 = vunpack.c.l.b16 %v270
    %v335 = vunpack.c.l.b16 %v271
    %v336 = vunpack.c.l.b16 %v272
    %v337 = vunpack.c.l.b16 %v273
    %v338 = vunpack.c.l.b16 %v274
    %v339 = vunpack.c.l.b16 %v275
    %v340 = vunpack.c.l.b16 %v276
    %v341 = vunpack.c.l.b16 %v277
    %v342 = vunpack.c.l.b16 %v278
    %v343 = vunpack.c.l.b16 %v279
    %v344 = vpack.c.b16 %v313, %v312
    %v345 = vpack.c.b16 %v315, %v314
    %v346 = vpack.c.b16 %v317, %v316
    %v347 = vpack.c.b16 %v319, %v318
    %v348 = vpack.c.b16 %v321, %v320
    %v349 = vpack.c.b16 %v323, %v322
    %v350 = vpack.c.b16 %v325, %v324
    %v351 = vpack.c.b16 %v327, %v326
    %v352 = vpack.c.b16 %v329, %v328
    %v353 = vpack.c.b16 %v331, %v330
    %v354 = vpack.c.b16 %v333, %v332
    %v355 = vpack.c.b16 %v335, %v334
    %v356 = vpack.c.b16 %v337, %v336
    %v357 = vpack.c.b16 %v339, %v338
    %v358 = vpack.c.b16 %v341, %v340
    %v359 = vpack.c.b16 %v343, %v342
    %376 = vmatpush.bf16.msra.mxu0 %v351
    %377 = vmatpush.bf16.msra.mxu0 %v350
    %378 = vmatpush.bf16.msra.mxu0 %v349
    %379 = vmatpush.bf16.msra.mxu0 %v348
    %380 = vmatpush.bf16.msra.mxu0 %v347
    %381 = vmatpush.bf16.msra.mxu0 %v346
    %382 = vmatpush.bf16.msra.mxu0 %v345
    %383 = vmatpush.bf16.msra.mxu0 %v344
    %384 = vmatmul.bf16.gmra.mxu0 %v246
    %v385 = vpop.f32.mrf.mxu0
    %v386 = vadd.f32 0.0, %v385
    %v387 = vpop.f32.mrf.mxu0
    %388 = vdwg.mxu0
    %389 = vmatpush.bf16.msra.mxu0 %v359
    %390 = vmatpush.bf16.msra.mxu0 %v358
    %391 = vmatpush.bf16.msra.mxu0 %v357
    %392 = vmatpush.bf16.msra.mxu0 %v356
    %393 = vmatpush.bf16.msra.mxu0 %v355
    %394 = vmatpush.bf16.msra.mxu0 %v354
    %395 = vmatpush.bf16.msra.mxu0 %v353
    %396 = vmatpush.bf16.msra.mxu0 %v352
    %397 = vmatmul.bf16.gmra.mxu0 %v247
    %v398 = vpop.f32.mrf.mxu0
    %v399 = vadd.f32 %v386, %v398
    %v400 = vpop.f32.mrf.mxu0
    %401 = vdwg.mxu0
    %v402 = vld [vmem:[%s6] sm:$0x1]
    %v404 = vperm.slane %v402, 0
    %v406 = vmul.f32 %v399, %v404
    %v407 = vld [vmem:[%s7] sm:$0x1]
    %v409 = vperm.slane %v407, 0
    %v411 = vadd.f32 %v406, %v409
    %v412 = vmax.f32 %v411, 0.0
    %v413 = vpack.c.bf16 %v412, %v412
    %414 = vst [vmem:[#allocation11] sm:$0xf] %v413
    // Predicated region
    $region54: #{tpu_custom_call.1} parent=1 // pred_check
      _
    $region55: #{tpu_custom_call.1} parent=1 // pred_check_branch
      %416 = sbr.rel (0) target = $region57
    $region56: #{tpu_custom_call.1} parent=1 // pred_region
      %418 = vsyncadd [#allocation4], 0
      %s420 = sshll.u32 [#allocation11], 4
      %s421 = int_to_ptr.vmem [resolvable:$true] %s420
      %s422 = sshll.u32 %s8, 4
      %s423 = int_to_ptr.hbm [resolvable:$true] %s422
      %425 = dma.vmem_to_hbm [thread:$0]  %s421, 64, %s423, [#allocation4]
    $region57: #{tpu_custom_call.1} parent=1 // pred_fallthru
      _
    // Predicated region
    $region58: #{tpu_custom_call.1} parent=1 // pred_check
      _
    $region59: #{tpu_custom_call.1} parent=1 // pred_check_branch
      %427 = sbr.rel (0) target = $region61
    $region60: #{tpu_custom_call.1} parent=1 // pred_region
      %429 = dma.done [#allocation4], 64
    $region61: #{tpu_custom_call.1} parent=1 // pred_fallthru
      _
    %430 = vsyncpa [#allocation3], 1
    %431 = vsyncpa [#allocation6], 1
    %432 = vsyncpa [#allocation9], 1
    %433 = vsyncpa [#allocation4], 1

</llo_original>
